<compile_context>
chip_gen: v7x
topology: tpu7x:2x2x1
jax: 0.10.0
libtpu: 0.0.40
codegen_flags: <defaults>
</compile_context>

<pallas_src>
import functools

import jax
import jax.numpy as jnp
from jax.experimental import pallas as pl
from jax.experimental.pallas import tpu as pltpu

NUM_PLAYERS = 7
NUM_EDGES = 21                 # C(7, 2)
INPUT_DIM = NUM_PLAYERS + 3    # 10
HIDDEN_DIM = 64
OUTPUT_DIM = NUM_EDGES         # 21

GATES = 4 * HIDDEN_DIM         # 256
D_PAD = 128                    # input feature dim padded to one full lane width
O_PAD = 128                    # fc output lane-padded so the final store is unmasked

# Row layout of the packed parameter slab (all sections start on 8-row boundaries).
ROW_WIH = 0                                # (D_PAD, 4H)  W_ih^T, zero-padded rows
ROW_WHH = ROW_WIH + D_PAD                  # 128: (H, 4H) W_hh^T
ROW_B = ROW_WHH + HIDDEN_DIM               # 192: (1, 4H) b_ih + b_hh
ROW_WFC = ROW_B + 8                        # 200: (H, O_PAD) W_fc^T (lane-padded)
ROW_BFC = ROW_WFC + HIDDEN_DIM             # 264: (1, O_PAD) b_fc  (lane-padded)
SLAB_ROWS = ROW_BFC + 8                    # 272


def _lstm_fc_kernel(x_ref, p_ref, out_ref, *, seq_len, batch):
    """Whole forward pass in one kernel invocation.

    x_ref:   (T * Bp, D_PAD)   time-major, batch- and lane-padded input
    p_ref:   (SLAB_ROWS, 4H)   packed parameters (gate column order [f,i,o,g])
    out_ref: (Bp, O_PAD)
    """
    H = HIDDEN_DIM

    # Hoisted single loads of every parameter section (one 16-vreg W_hh load for the
    # whole unrolled recurrence, not one per step).
    w_ih = p_ref[ROW_WIH:ROW_WIH + D_PAD, :]          # (128, 256)
    w_hh = p_ref[ROW_WHH:ROW_WHH + H, :]              # (64, 256)
    b = p_ref[ROW_B:ROW_B + 1, :]                     # (1, 256)
    w_fc = p_ref[ROW_WFC:ROW_WFC + H, 0:O_PAD]        # (64, 128)
    b_fc = p_ref[ROW_BFC:ROW_BFC + 1, 0:O_PAD]        # (1, 128)

    # All timesteps' input projections in one MXU matmul, off the serial path.
    xg = jnp.dot(x_ref[...], w_ih,
                 preferred_element_type=jnp.float32) + b          # (T*Bp, 4H)

    # Hoisted activation constants.  Gate column order is [f | i | o | g]; only the
    # last H lanes (g) get tanh, everything else gets sigmoid = 0.5*(tanh(0.5*x)+1).
    col = jax.lax.broadcasted_iota(jnp.int32, (batch, GATES), 1)
    is_g = col >= 3 * H
    scale = jnp.where(is_g, 1.0, 0.5).astype(jnp.float32)         # (Bp, 4H)
    shift = jnp.where(is_g, 0.0, 0.5).astype(jnp.float32)         # (Bp, 4H)

    h = jnp.zeros((batch, H), jnp.float32)
    c = jnp.zeros((batch, H), jnp.float32)

    # T is small and static -> fully unrolled recurrence; exactly one MXU push
    # (h @ W_hh) plus one wide EUP tanh per step on the loop-carried critical path.
    for t in range(seq_len):
        gates = (xg[t * batch:(t + 1) * batch, :]                 # aligned 8-row slice
                 + jnp.dot(h, w_hh, preferred_element_type=jnp.float32))
        tz = jnp.tanh(gates * scale)          # one full-width (2-vreg) EUP push
        act = tz * scale + shift              # sigmoid for f,i,o ; tanh for g
        f_g = act[:, 0 * H:1 * H]             # lane offset 0  (aligned with c)
        i_g = act[:, 1 * H:2 * H]             # lane offset 64
        o_g = act[:, 2 * H:3 * H]             # lane offset 0  (aligned with tanh(c))
        g_g = act[:, 3 * H:4 * H]             # lane offset 64 (aligned with i_g)
        c = f_g * c + i_g * g_g
        h = o_g * jnp.tanh(c)

    out_ref[...] = jnp.dot(h, w_fc, preferred_element_type=jnp.float32) + b_fc


@jax.jit
def relationship_lstm_forward(x, param_slab):
    """x: (B, T, INPUT_DIM) float32; param_slab: (SLAB_ROWS, 4H) packed params."""
    B, T, D = x.shape

    # Pad batch to a multiple of 8 (vreg sublanes) and the feature dim to 128 lanes,
    # and lay x out time-major so the kernel takes contiguous sublane-aligned slices.
    B_pad = max(8, ((B + 7) // 8) * 8)
    x_tm = jnp.swapaxes(x, 0, 1)                                   # (T, B, D)
    x_tm = jnp.pad(x_tm, ((0, 0), (0, B_pad - B), (0, D_PAD - D)))
    x2d = x_tm.reshape(T * B_pad, D_PAD)                           # (T*Bp, 128)

    vmem = pl.BlockSpec(memory_space=pltpu.MemorySpace.VMEM)
    out_pad = pl.pallas_call(
        functools.partial(_lstm_fc_kernel, seq_len=T, batch=B_pad),
        out_shape=jax.ShapeDtypeStruct((B_pad, O_PAD), jnp.float32),
        in_specs=[vmem, vmem],     # two dense DMAs; everything resident (< 0.5 MiB)
        out_specs=vmem,
    )(x2d, param_slab)
    return out_pad[:B, :OUTPUT_DIM]


def pack_params(raw):
    """Wrapper-side (one-time) packing: permute gates [i,f,g,o] -> [f,i,o,g], pad the
    FC output to 128 lanes, and concatenate everything into one (272, 256) slab."""
    H, D, O = HIDDEN_DIM, INPUT_DIM, OUTPUT_DIM
    perm = jnp.concatenate([jnp.arange(H, 2 * H),        # f
                            jnp.arange(0, H),            # i
                            jnp.arange(3 * H, 4 * H),    # o
                            jnp.arange(2 * H, 3 * H)])   # g
    w_ih_t = raw["w_ih"].T[:, perm]                      # (D, 4H)
    w_hh_t = raw["w_hh"].T[:, perm]                      # (H, 4H)
    b = (raw["b_ih"] + raw["b_hh"])[perm]                # (4H,)

    slab = jnp.zeros((SLAB_ROWS, GATES), jnp.float32)
    slab = slab.at[ROW_WIH:ROW_WIH + D, :].set(w_ih_t)
    slab = slab.at[ROW_WHH:ROW_WHH + H, :].set(w_hh_t)
    slab = slab.at[ROW_B, :].set(b)
    slab = slab.at[ROW_WFC:ROW_WFC + H, 0:O].set(raw["w_fc"].T)
    slab = slab.at[ROW_BFC, 0:O].set(raw["b_fc"])
    return slab


def init_params(key):
    """Deterministic init mirroring PyTorch's uniform(-1/sqrt(H), 1/sqrt(H)),
    returned in raw PyTorch layout / gate order [i,f,g,o]."""
    k = jax.random.split(key, 6)
    H, D, O = HIDDEN_DIM, INPUT_DIM, OUTPUT_DIM
    bound = 1.0 / jnp.sqrt(H)
    return dict(
        w_ih=jax.random.uniform(k[0], (4 * H, D), jnp.float32, -bound, bound),
        w_hh=jax.random.uniform(k[1], (4 * H, H), jnp.float32, -bound, bound),
        b_ih=jax.random.uniform(k[2], (4 * H,), jnp.float32, -bound, bound),
        b_hh=jax.random.uniform(k[3], (4 * H,), jnp.float32, -bound, bound),
        w_fc=jax.random.uniform(k[4], (O, H), jnp.float32, -bound, bound),
        b_fc=jax.random.uniform(k[5], (O,), jnp.float32, -bound, bound),
    )


def reference_forward(x, raw):
    """Plain-JAX mirror of the PyTorch forward (gate order i,f,g,o, exact sigmoid)."""
    H = HIDDEN_DIM
    w_ih_t, w_hh_t = raw["w_ih"].T, raw["w_hh"].T
    b = (raw["b_ih"] + raw["b_hh"]).reshape(1, -1)
    B = x.shape[0]
    h0 = jnp.zeros((B, H), jnp.float32)
    c0 = jnp.zeros((B, H), jnp.float32)

    def step(carry, x_t):
        h, c = carry
        gates = x_t @ w_ih_t + h @ w_hh_t + b
        i = jax.nn.sigmoid(gates[:, 0 * H:1 * H])
        f = jax.nn.sigmoid(gates[:, 1 * H:2 * H])
        g = jnp.tanh(gates[:, 2 * H:3 * H])
        o = jax.nn.sigmoid(gates[:, 3 * H:4 * H])
        c = f * c + i * g
        h = o * jnp.tanh(c)
        return (h, c), None

    (h_last, _), _ = jax.lax.scan(step, (h0, c0), jnp.swapaxes(x, 0, 1))
    return h_last @ raw["w_fc"].T + raw["b_fc"].reshape(1, -1)


if __name__ == "__main__":
    key = jax.random.PRNGKey(0)
    k_param, k_x = jax.random.split(key)

    B, T = 2, 8
    raw = init_params(k_param)
    slab = pack_params(raw)
    x = jax.random.normal(k_x, (B, T, INPUT_DIM), jnp.float32)

    out = jax.block_until_ready(relationship_lstm_forward(x, slab))
    ref = jax.block_until_ready(reference_forward(x, raw))

    assert out.shape == (B, OUTPUT_DIM)
    # tanh-form sigmoid is mathematically exact; tolerance leaves margin for the
    # slightly different EUP lowering vs jax.nn.sigmoid in the reference.
    assert jnp.allclose(out, ref, atol=1e-4, rtol=1e-4), \
        float(jnp.max(jnp.abs(out - ref)))

    print("KERNEL_OK")
</pallas_src>

<mosaic_0001>
module attributes {stable_mosaic.version = 11 : i64} {
  func.func @_lstm_fc_kernel(%arg0: memref<64x128xf32, #tpu.memory_space<vmem>>, %arg1: memref<272x256xf32, #tpu.memory_space<vmem>>, %arg2: memref<8x128xf32, #tpu.memory_space<vmem>>) attributes {dimension_semantics = [], scalar_prefetch = 0 : i64, scratch_operands = 0 : i64, tpu.core_type = #tpu.core_type<tc>} {
    %c0 = arith.constant 0 : index
    %c0_0 = arith.constant 0 : index
    %0 = vector.load %arg1[%c0, %c0_0] : memref<272x256xf32, #tpu.memory_space<vmem>>, vector<128x256xf32>
    %c128 = arith.constant 128 : index
    %c0_1 = arith.constant 0 : index
    %1 = vector.load %arg1[%c128, %c0_1] : memref<272x256xf32, #tpu.memory_space<vmem>>, vector<64x256xf32>
    %c192 = arith.constant 192 : index
    %c0_2 = arith.constant 0 : index
    %2 = vector.load %arg1[%c192, %c0_2] : memref<272x256xf32, #tpu.memory_space<vmem>>, vector<1x256xf32>
    %c200 = arith.constant 200 : index
    %c0_3 = arith.constant 0 : index
    %3 = vector.load %arg1[%c200, %c0_3] : memref<272x256xf32, #tpu.memory_space<vmem>>, vector<64x128xf32>
    %c264 = arith.constant 264 : index
    %c0_4 = arith.constant 0 : index
    %4 = vector.load %arg1[%c264, %c0_4] : memref<272x256xf32, #tpu.memory_space<vmem>>, vector<1x128xf32>
    %c0_5 = arith.constant 0 : index
    %c0_6 = arith.constant 0 : index
    %5 = vector.load %arg0[%c0_5, %c0_6] : memref<64x128xf32, #tpu.memory_space<vmem>>, vector<64x128xf32>
    %cst = arith.constant dense<0.000000e+00> : vector<64x256xf32>
    %6 = tpu.matmul %5, %0, %cst {dimension_numbers = #tpu.dot_dimension_numbers<[1], [0], [0], [1], [0, 0, 1, 1], [], []>} : vector<64x128xf32>, vector<128x256xf32>, vector<64x256xf32> -> vector<64x256xf32>
    %7 = vector.broadcast %2 : vector<1x256xf32> to vector<64x256xf32>
    %8 = arith.addf %6, %7 : vector<64x256xf32>
    %9 = tpu.iota {dimensions = array<i32: 1>} : vector<8x256xi32>
    %c192_i32 = arith.constant 192 : i32
    %10 = vector.broadcast %c192_i32 : i32 to vector<8x256xi32>
    %11 = arith.cmpi sge, %9, %10 : vector<8x256xi32>
    %cst_7 = arith.constant 1.000000e+00 : f32
    %cst_8 = arith.constant 5.000000e-01 : f32
    %12 = vector.broadcast %cst_7 : f32 to vector<8x256xf32>
    %13 = vector.broadcast %cst_8 : f32 to vector<8x256xf32>
    %14 = arith.select %11, %12, %13 : vector<8x256xi1>, vector<8x256xf32>
    %cst_9 = arith.constant 0.000000e+00 : f32
    %cst_10 = arith.constant 5.000000e-01 : f32
    %15 = vector.broadcast %cst_9 : f32 to vector<8x256xf32>
    %16 = vector.broadcast %cst_10 : f32 to vector<8x256xf32>
    %17 = arith.select %11, %15, %16 : vector<8x256xi1>, vector<8x256xf32>
    %cst_11 = arith.constant 0.000000e+00 : f32
    %18 = vector.broadcast %cst_11 : f32 to vector<8x64xf32>
    %cst_12 = arith.constant 0.000000e+00 : f32
    %19 = vector.broadcast %cst_12 : f32 to vector<8x64xf32>
    %20 = vector.extract_strided_slice %8 {offsets = [0, 0], sizes = [8, 256], strides = [1, 1]} : vector<64x256xf32> to vector<8x256xf32>
    %cst_13 = arith.constant dense<0.000000e+00> : vector<8x256xf32>
    %21 = tpu.matmul %18, %1, %cst_13 {dimension_numbers = #tpu.dot_dimension_numbers<[1], [0], [0], [1], [0, 0, 1, 1], [], []>} : vector<8x64xf32>, vector<64x256xf32>, vector<8x256xf32> -> vector<8x256xf32>
    %22 = arith.addf %20, %21 : vector<8x256xf32>
    %23 = arith.mulf %22, %14 : vector<8x256xf32>
    %24 = math.tanh %23 : vector<8x256xf32>
    %25 = arith.mulf %24, %14 : vector<8x256xf32>
    %26 = arith.addf %25, %17 : vector<8x256xf32>
    %27 = vector.extract_strided_slice %26 {offsets = [0, 0], sizes = [8, 64], strides = [1, 1]} : vector<8x256xf32> to vector<8x64xf32>
    %28 = vector.extract_strided_slice %26 {offsets = [0, 64], sizes = [8, 64], strides = [1, 1]} : vector<8x256xf32> to vector<8x64xf32>
    %29 = vector.extract_strided_slice %26 {offsets = [0, 128], sizes = [8, 64], strides = [1, 1]} : vector<8x256xf32> to vector<8x64xf32>
    %30 = vector.extract_strided_slice %26 {offsets = [0, 192], sizes = [8, 64], strides = [1, 1]} : vector<8x256xf32> to vector<8x64xf32>
    %31 = arith.mulf %27, %19 : vector<8x64xf32>
    %32 = arith.mulf %28, %30 : vector<8x64xf32>
    %33 = arith.addf %31, %32 : vector<8x64xf32>
    %34 = math.tanh %33 : vector<8x64xf32>
    %35 = arith.mulf %29, %34 : vector<8x64xf32>
    %36 = vector.extract_strided_slice %8 {offsets = [8, 0], sizes = [8, 256], strides = [1, 1]} : vector<64x256xf32> to vector<8x256xf32>
    %cst_14 = arith.constant dense<0.000000e+00> : vector<8x256xf32>
    %37 = tpu.matmul %35, %1, %cst_14 {dimension_numbers = #tpu.dot_dimension_numbers<[1], [0], [0], [1], [0, 0, 1, 1], [], []>} : vector<8x64xf32>, vector<64x256xf32>, vector<8x256xf32> -> vector<8x256xf32>
    %38 = arith.addf %36, %37 : vector<8x256xf32>
    %39 = arith.mulf %38, %14 : vector<8x256xf32>
    %40 = math.tanh %39 : vector<8x256xf32>
    %41 = arith.mulf %40, %14 : vector<8x256xf32>
    %42 = arith.addf %41, %17 : vector<8x256xf32>
    %43 = vector.extract_strided_slice %42 {offsets = [0, 0], sizes = [8, 64], strides = [1, 1]} : vector<8x256xf32> to vector<8x64xf32>
    %44 = vector.extract_strided_slice %42 {offsets = [0, 64], sizes = [8, 64], strides = [1, 1]} : vector<8x256xf32> to vector<8x64xf32>
    %45 = vector.extract_strided_slice %42 {offsets = [0, 128], sizes = [8, 64], strides = [1, 1]} : vector<8x256xf32> to vector<8x64xf32>
    %46 = vector.extract_strided_slice %42 {offsets = [0, 192], sizes = [8, 64], strides = [1, 1]} : vector<8x256xf32> to vector<8x64xf32>
    %47 = arith.mulf %43, %33 : vector<8x64xf32>
    %48 = arith.mulf %44, %46 : vector<8x64xf32>
    %49 = arith.addf %47, %48 : vector<8x64xf32>
    %50 = math.tanh %49 : vector<8x64xf32>
    %51 = arith.mulf %45, %50 : vector<8x64xf32>
    %52 = vector.extract_strided_slice %8 {offsets = [16, 0], sizes = [8, 256], strides = [1, 1]} : vector<64x256xf32> to vector<8x256xf32>
    %cst_15 = arith.constant dense<0.000000e+00> : vector<8x256xf32>
    %53 = tpu.matmul %51, %1, %cst_15 {dimension_numbers = #tpu.dot_dimension_numbers<[1], [0], [0], [1], [0, 0, 1, 1], [], []>} : vector<8x64xf32>, vector<64x256xf32>, vector<8x256xf32> -> vector<8x256xf32>
    %54 = arith.addf %52, %53 : vector<8x256xf32>
    %55 = arith.mulf %54, %14 : vector<8x256xf32>
    %56 = math.tanh %55 : vector<8x256xf32>
    %57 = arith.mulf %56, %14 : vector<8x256xf32>
    %58 = arith.addf %57, %17 : vector<8x256xf32>
    %59 = vector.extract_strided_slice %58 {offsets = [0, 0], sizes = [8, 64], strides = [1, 1]} : vector<8x256xf32> to vector<8x64xf32>
    %60 = vector.extract_strided_slice %58 {offsets = [0, 64], sizes = [8, 64], strides = [1, 1]} : vector<8x256xf32> to vector<8x64xf32>
    %61 = vector.extract_strided_slice %58 {offsets = [0, 128], sizes = [8, 64], strides = [1, 1]} : vector<8x256xf32> to vector<8x64xf32>
    %62 = vector.extract_strided_slice %58 {offsets = [0, 192], sizes = [8, 64], strides = [1, 1]} : vector<8x256xf32> to vector<8x64xf32>
    %63 = arith.mulf %59, %49 : vector<8x64xf32>
    %64 = arith.mulf %60, %62 : vector<8x64xf32>
    %65 = arith.addf %63, %64 : vector<8x64xf32>
    %66 = math.tanh %65 : vector<8x64xf32>
    %67 = arith.mulf %61, %66 : vector<8x64xf32>
    %68 = vector.extract_strided_slice %8 {offsets = [24, 0], sizes = [8, 256], strides = [1, 1]} : vector<64x256xf32> to vector<8x256xf32>
    %cst_16 = arith.constant dense<0.000000e+00> : vector<8x256xf32>
    %69 = tpu.matmul %67, %1, %cst_16 {dimension_numbers = #tpu.dot_dimension_numbers<[1], [0], [0], [1], [0, 0, 1, 1], [], []>} : vector<8x64xf32>, vector<64x256xf32>, vector<8x256xf32> -> vector<8x256xf32>
    %70 = arith.addf %68, %69 : vector<8x256xf32>
    %71 = arith.mulf %70, %14 : vector<8x256xf32>
    %72 = math.tanh %71 : vector<8x256xf32>
    %73 = arith.mulf %72, %14 : vector<8x256xf32>
    %74 = arith.addf %73, %17 : vector<8x256xf32>
    %75 = vector.extract_strided_slice %74 {offsets = [0, 0], sizes = [8, 64], strides = [1, 1]} : vector<8x256xf32> to vector<8x64xf32>
    %76 = vector.extract_strided_slice %74 {offsets = [0, 64], sizes = [8, 64], strides = [1, 1]} : vector<8x256xf32> to vector<8x64xf32>
    %77 = vector.extract_strided_slice %74 {offsets = [0, 128], sizes = [8, 64], strides = [1, 1]} : vector<8x256xf32> to vector<8x64xf32>
    %78 = vector.extract_strided_slice %74 {offsets = [0, 192], sizes = [8, 64], strides = [1, 1]} : vector<8x256xf32> to vector<8x64xf32>
    %79 = arith.mulf %75, %65 : vector<8x64xf32>
    %80 = arith.mulf %76, %78 : vector<8x64xf32>
    %81 = arith.addf %79, %80 : vector<8x64xf32>
    %82 = math.tanh %81 : vector<8x64xf32>
    %83 = arith.mulf %77, %82 : vector<8x64xf32>
    %84 = vector.extract_strided_slice %8 {offsets = [32, 0], sizes = [8, 256], strides = [1, 1]} : vector<64x256xf32> to vector<8x256xf32>
    %cst_17 = arith.constant dense<0.000000e+00> : vector<8x256xf32>
    %85 = tpu.matmul %83, %1, %cst_17 {dimension_numbers = #tpu.dot_dimension_numbers<[1], [0], [0], [1], [0, 0, 1, 1], [], []>} : vector<8x64xf32>, vector<64x256xf32>, vector<8x256xf32> -> vector<8x256xf32>
    %86 = arith.addf %84, %85 : vector<8x256xf32>
    %87 = arith.mulf %86, %14 : vector<8x256xf32>
    %88 = math.tanh %87 : vector<8x256xf32>
    %89 = arith.mulf %88, %14 : vector<8x256xf32>
    %90 = arith.addf %89, %17 : vector<8x256xf32>
    %91 = vector.extract_strided_slice %90 {offsets = [0, 0], sizes = [8, 64], strides = [1, 1]} : vector<8x256xf32> to vector<8x64xf32>
    %92 = vector.extract_strided_slice %90 {offsets = [0, 64], sizes = [8, 64], strides = [1, 1]} : vector<8x256xf32> to vector<8x64xf32>
    %93 = vector.extract_strided_slice %90 {offsets = [0, 128], sizes = [8, 64], strides = [1, 1]} : vector<8x256xf32> to vector<8x64xf32>
    %94 = vector.extract_strided_slice %90 {offsets = [0, 192], sizes = [8, 64], strides = [1, 1]} : vector<8x256xf32> to vector<8x64xf32>
    %95 = arith.mulf %91, %81 : vector<8x64xf32>
    %96 = arith.mulf %92, %94 : vector<8x64xf32>
    %97 = arith.addf %95, %96 : vector<8x64xf32>
    %98 = math.tanh %97 : vector<8x64xf32>
    %99 = arith.mulf %93, %98 : vector<8x64xf32>
    %100 = vector.extract_strided_slice %8 {offsets = [40, 0], sizes = [8, 256], strides = [1, 1]} : vector<64x256xf32> to vector<8x256xf32>
    %cst_18 = arith.constant dense<0.000000e+00> : vector<8x256xf32>
    %101 = tpu.matmul %99, %1, %cst_18 {dimension_numbers = #tpu.dot_dimension_numbers<[1], [0], [0], [1], [0, 0, 1, 1], [], []>} : vector<8x64xf32>, vector<64x256xf32>, vector<8x256xf32> -> vector<8x256xf32>
    %102 = arith.addf %100, %101 : vector<8x256xf32>
    %103 = arith.mulf %102, %14 : vector<8x256xf32>
    %104 = math.tanh %103 : vector<8x256xf32>
    %105 = arith.mulf %104, %14 : vector<8x256xf32>
    %106 = arith.addf %105, %17 : vector<8x256xf32>
    %107 = vector.extract_strided_slice %106 {offsets = [0, 0], sizes = [8, 64], strides = [1, 1]} : vector<8x256xf32> to vector<8x64xf32>
    %108 = vector.extract_strided_slice %106 {offsets = [0, 64], sizes = [8, 64], strides = [1, 1]} : vector<8x256xf32> to vector<8x64xf32>
    %109 = vector.extract_strided_slice %106 {offsets = [0, 128], sizes = [8, 64], strides = [1, 1]} : vector<8x256xf32> to vector<8x64xf32>
    %110 = vector.extract_strided_slice %106 {offsets = [0, 192], sizes = [8, 64], strides = [1, 1]} : vector<8x256xf32> to vector<8x64xf32>
    %111 = arith.mulf %107, %97 : vector<8x64xf32>
    %112 = arith.mulf %108, %110 : vector<8x64xf32>
    %113 = arith.addf %111, %112 : vector<8x64xf32>
    %114 = math.tanh %113 : vector<8x64xf32>
    %115 = arith.mulf %109, %114 : vector<8x64xf32>
    %116 = vector.extract_strided_slice %8 {offsets = [48, 0], sizes = [8, 256], strides = [1, 1]} : vector<64x256xf32> to vector<8x256xf32>
    %cst_19 = arith.constant dense<0.000000e+00> : vector<8x256xf32>
    %117 = tpu.matmul %115, %1, %cst_19 {dimension_numbers = #tpu.dot_dimension_numbers<[1], [0], [0], [1], [0, 0, 1, 1], [], []>} : vector<8x64xf32>, vector<64x256xf32>, vector<8x256xf32> -> vector<8x256xf32>
    %118 = arith.addf %116, %117 : vector<8x256xf32>
    %119 = arith.mulf %118, %14 : vector<8x256xf32>
    %120 = math.tanh %119 : vector<8x256xf32>
    %121 = arith.mulf %120, %14 : vector<8x256xf32>
    %122 = arith.addf %121, %17 : vector<8x256xf32>
    %123 = vector.extract_strided_slice %122 {offsets = [0, 0], sizes = [8, 64], strides = [1, 1]} : vector<8x256xf32> to vector<8x64xf32>
    %124 = vector.extract_strided_slice %122 {offsets = [0, 64], sizes = [8, 64], strides = [1, 1]} : vector<8x256xf32> to vector<8x64xf32>
    %125 = vector.extract_strided_slice %122 {offsets = [0, 128], sizes = [8, 64], strides = [1, 1]} : vector<8x256xf32> to vector<8x64xf32>
    %126 = vector.extract_strided_slice %122 {offsets = [0, 192], sizes = [8, 64], strides = [1, 1]} : vector<8x256xf32> to vector<8x64xf32>
    %127 = arith.mulf %123, %113 : vector<8x64xf32>
    %128 = arith.mulf %124, %126 : vector<8x64xf32>
    %129 = arith.addf %127, %128 : vector<8x64xf32>
    %130 = math.tanh %129 : vector<8x64xf32>
    %131 = arith.mulf %125, %130 : vector<8x64xf32>
    %132 = vector.extract_strided_slice %8 {offsets = [56, 0], sizes = [8, 256], strides = [1, 1]} : vector<64x256xf32> to vector<8x256xf32>
    %cst_20 = arith.constant dense<0.000000e+00> : vector<8x256xf32>
    %133 = tpu.matmul %131, %1, %cst_20 {dimension_numbers = #tpu.dot_dimension_numbers<[1], [0], [0], [1], [0, 0, 1, 1], [], []>} : vector<8x64xf32>, vector<64x256xf32>, vector<8x256xf32> -> vector<8x256xf32>
    %134 = arith.addf %132, %133 : vector<8x256xf32>
    %135 = arith.mulf %134, %14 : vector<8x256xf32>
    %136 = math.tanh %135 : vector<8x256xf32>
    %137 = arith.mulf %136, %14 : vector<8x256xf32>
    %138 = arith.addf %137, %17 : vector<8x256xf32>
    %139 = vector.extract_strided_slice %138 {offsets = [0, 0], sizes = [8, 64], strides = [1, 1]} : vector<8x256xf32> to vector<8x64xf32>
    %140 = vector.extract_strided_slice %138 {offsets = [0, 64], sizes = [8, 64], strides = [1, 1]} : vector<8x256xf32> to vector<8x64xf32>
    %141 = vector.extract_strided_slice %138 {offsets = [0, 128], sizes = [8, 64], strides = [1, 1]} : vector<8x256xf32> to vector<8x64xf32>
    %142 = vector.extract_strided_slice %138 {offsets = [0, 192], sizes = [8, 64], strides = [1, 1]} : vector<8x256xf32> to vector<8x64xf32>
    %143 = arith.mulf %139, %129 : vector<8x64xf32>
    %144 = arith.mulf %140, %142 : vector<8x64xf32>
    %145 = arith.addf %143, %144 : vector<8x64xf32>
    %146 = math.tanh %145 : vector<8x64xf32>
    %147 = arith.mulf %141, %146 : vector<8x64xf32>
    %cst_21 = arith.constant dense<0.000000e+00> : vector<8x128xf32>
    %148 = tpu.matmul %147, %3, %cst_21 {dimension_numbers = #tpu.dot_dimension_numbers<[1], [0], [0], [1], [0, 0, 1, 1], [], []>} : vector<8x64xf32>, vector<64x128xf32>, vector<8x128xf32> -> vector<8x128xf32>
    %149 = vector.broadcast %4 : vector<1x128xf32> to vector<8x128xf32>
    %150 = arith.addf %148, %149 : vector<8x128xf32>
    %c0_22 = arith.constant 0 : index
    %c0_23 = arith.constant 0 : index
    %151 = vector.load %arg2[%c0_22, %c0_23] : memref<8x128xf32, #tpu.memory_space<vmem>>, vector<8x128xf32>
    tpu.vector_store %arg2[%c0_22, %c0_23], %150 {strides = array<i32>} : memref<8x128xf32, #tpu.memory_space<vmem>>, vector<8x128xf32>,
    return
  }
}

</mosaic_0001>

<llo_original>
// kernel: relationship_lstm_forward.1
$region0: #{relationship_lstm_forward.1}
  #allocation0 [shape = 'u32[]', space=smem, size = 0x4, offset = 0x4, fixed_abs, tag = 'smem constant byte address 0x4 - core index']
  #allocation1 [shape = 'u32[144,128]{1,0:T(1,128)}', space=vmem, size = 0x12000, scoped, tag = 'internal scratch']
  %s0 = inlined_call_operand.vmem [shape: f32[64,128], index: 0, kind: input, shape index: {}]
  %s1 = inlined_call_operand.hbm [shape: f32[272,256], index: 1, kind: input, shape index: {}]
  %s2 = inlined_call_operand.vmem [shape: f32[8,128], index: 2, kind: output, shape index: {}]
  %s3 = sld [smem:[#allocation0]]
  $region22: #{relationship_lstm_forward.1} parent=0
    _
  %s5 = ssub.s32 1, %s3
  %s6 = scalar_select 0, %s5, %s3
  $region1: #{relationship_lstm_forward.1} parent=0
    #allocation2 [shape = 'u8[278528]{0}', space=vmem, size = 0x44000, scoped, tag = 'input window, operand 1, single buffered']
    #allocation3 [shape = 's32[1]{0}', space=sflag, size = 0x4, scoped, tag = 'scoped memory for relationship_lstm_forward.1']
    %7 = vsyncpa [#allocation3], 0
    // Predicated region
    $region2: #{relationship_lstm_forward.1} parent=1 // pred_check
      _
    $region3: #{relationship_lstm_forward.1} parent=1 // pred_check_branch
      %9 = sbr.rel (0) target = $region5
    $region4: #{relationship_lstm_forward.1} parent=1 // pred_region
      _
    $region5: #{relationship_lstm_forward.1} parent=1 // pred_fallthru
      _
    // Predicated region
    $region6: #{relationship_lstm_forward.1} parent=1 // pred_check
      _
    $region7: #{relationship_lstm_forward.1} parent=1 // pred_check_branch
      %11 = sbr.rel (0) target = $region9
    $region8: #{relationship_lstm_forward.1} parent=1 // pred_region
      %s13 = ssub.s32 8704, 8704
      %14 = vsyncadd [#allocation3], %s13
      %s15 = sshll.u32 [#allocation2], 4
      %s16 = int_to_ptr.vmem [resolvable:$true] %s15
      %21 = dma.hbm_to_vmem [thread:$0]  %s1, 8704, %s16, [#allocation3], 256, 256, 16
    $region9: #{relationship_lstm_forward.1} parent=1 // pred_fallthru
      _
    // Predicated region
    $region10: #{relationship_lstm_forward.1} parent=1 // pred_check
      _
    $region11: #{relationship_lstm_forward.1} parent=1 // pred_check_branch
      %23 = sbr.rel (0) target = $region13
    $region12: #{relationship_lstm_forward.1} parent=1 // pred_region
      %24 = dma.done [#allocation3], 8704
    $region13: #{relationship_lstm_forward.1} parent=1 // pred_fallthru
      _
    %v25 = vld [vmem:[#allocation2] sm:$0xff]
    %v26 = vld [vmem:[#allocation2 + $0x8] sm:$0xff]
    %v27 = vld [vmem:[#allocation2 + $0x10] sm:$0xff]
    %v28 = vld [vmem:[#allocation2 + $0x18] sm:$0xff]
    %v29 = vld [vmem:[#allocation2 + $0x20] sm:$0xff]
    %v30 = vld [vmem:[#allocation2 + $0x28] sm:$0xff]
    %v31 = vld [vmem:[#allocation2 + $0x30] sm:$0xff]
    %v32 = vld [vmem:[#allocation2 + $0x38] sm:$0xff]
    %v33 = vld [vmem:[#allocation2 + $0x40] sm:$0xff]
    %v34 = vld [vmem:[#allocation2 + $0x48] sm:$0xff]
    %v35 = vld [vmem:[#allocation2 + $0x50] sm:$0xff]
    %v36 = vld [vmem:[#allocation2 + $0x58] sm:$0xff]
    %v37 = vld [vmem:[#allocation2 + $0x60] sm:$0xff]
    %v38 = vld [vmem:[#allocation2 + $0x68] sm:$0xff]
    %v39 = vld [vmem:[#allocation2 + $0x70] sm:$0xff]
    %v40 = vld [vmem:[#allocation2 + $0x78] sm:$0xff]
    %v41 = vld [vmem:[#allocation2 + $0x80] sm:$0xff]
    %v42 = vld [vmem:[#allocation2 + $0x88] sm:$0xff]
    %v43 = vld [vmem:[#allocation2 + $0x90] sm:$0xff]
    %v44 = vld [vmem:[#allocation2 + $0x98] sm:$0xff]
    %v45 = vld [vmem:[#allocation2 + $0xa0] sm:$0xff]
    %v46 = vld [vmem:[#allocation2 + $0xa8] sm:$0xff]
    %v47 = vld [vmem:[#allocation2 + $0xb0] sm:$0xff]
    %v48 = vld [vmem:[#allocation2 + $0xb8] sm:$0xff]
    %v49 = vld [vmem:[#allocation2 + $0xc0] sm:$0xff]
    %v50 = vld [vmem:[#allocation2 + $0xc8] sm:$0xff]
    %v51 = vld [vmem:[#allocation2 + $0xd0] sm:$0xff]
    %v52 = vld [vmem:[#allocation2 + $0xd8] sm:$0xff]
    %v53 = vld [vmem:[#allocation2 + $0xe0] sm:$0xff]
    %v54 = vld [vmem:[#allocation2 + $0xe8] sm:$0xff]
    %v55 = vld [vmem:[#allocation2 + $0xf0] sm:$0xff]
    %v56 = vld [vmem:[#allocation2 + $0xf8] sm:$0xff]
    %v57 = vld [vmem:[#allocation2 + $0x100] sm:$0xff]
    %v58 = vld [vmem:[#allocation2 + $0x108] sm:$0xff]
    %v59 = vld [vmem:[#allocation2 + $0x110] sm:$0xff]
    %v60 = vld [vmem:[#allocation2 + $0x118] sm:$0xff]
    %v61 = vld [vmem:[#allocation2 + $0x120] sm:$0xff]
    %v62 = vld [vmem:[#allocation2 + $0x128] sm:$0xff]
    %v63 = vld [vmem:[#allocation2 + $0x130] sm:$0xff]
    %v64 = vld [vmem:[#allocation2 + $0x138] sm:$0xff]
    %v65 = vld [vmem:[#allocation2 + $0x140] sm:$0xff]
    %v66 = vld [vmem:[#allocation2 + $0x148] sm:$0xff]
    %v67 = vld [vmem:[#allocation2 + $0x150] sm:$0xff]
    %v68 = vld [vmem:[#allocation2 + $0x158] sm:$0xff]
    %v69 = vld [vmem:[#allocation2 + $0x160] sm:$0xff]
    %v70 = vld [vmem:[#allocation2 + $0x168] sm:$0xff]
    %v71 = vld [vmem:[#allocation2 + $0x170] sm:$0xff]
    %v72 = vld [vmem:[#allocation2 + $0x178] sm:$0xff]
    %s73 = scalar_lea.vmem [#allocation2], 384
    %v74 = vld [vmem:[%s73] ss:$8 sm:$0x3]
    %v75 = vld [vmem:[#allocation2 + $0x190] sm:$0xff]
    %v76 = vld [vmem:[#allocation2 + $0x1a0] sm:$0xff]
    %v77 = vld [vmem:[#allocation2 + $0x1b0] sm:$0xff]
    %v78 = vld [vmem:[#allocation2 + $0x1c0] sm:$0xff]
    %v79 = vld [vmem:[#allocation2 + $0x1d0] sm:$0xff]
    %v80 = vld [vmem:[#allocation2 + $0x1e0] sm:$0xff]
    %v81 = vld [vmem:[#allocation2 + $0x1f0] sm:$0xff]
    %v82 = vld [vmem:[#allocation2 + $0x200] sm:$0xff]
    %v83 = vld [vmem:[#allocation2 + $0x210] ss:$0 sm:$0xff]
    %v84 = vld [vmem:[%s0] sm:$0xff]
    %v85 = vld [vmem:[%s0 + $0x8] sm:$0xff]
    %v86 = vld [vmem:[%s0 + $0x10] sm:$0xff]
    %v87 = vld [vmem:[%s0 + $0x18] sm:$0xff]
    %v88 = vld [vmem:[%s0 + $0x20] sm:$0xff]
    %v89 = vld [vmem:[%s0 + $0x28] sm:$0xff]
    %v90 = vld [vmem:[%s0 + $0x30] sm:$0xff]
    %v91 = vld [vmem:[%s0 + $0x38] sm:$0xff]
    %v93 = vlaneseq
    %v94 = vshrl.u32 %v93, 7
    %v95 = vsub.s32 0, %v94
    %v96 = vrot.slane %v74, %v95
    %v97 = vlaneseq
    %v98 = vshrl.u32 %v97, 7
    %v99 = vsub.s32 1, %v98
    %v100 = vrot.slane %v74, %v99
    %103 = vmatprep.subr.mxu0 %v26
    %104 = vmatpush1.msra.mxu0 %v25
    %105 = vmatprep.subr.mxu0 %v28
    %106 = vmatpush1.msra.mxu0 %v27
    %107 = vmatprep.subr.mxu0 %v30
    %108 = vmatpush1.msra.mxu0 %v29
    %109 = vmatprep.subr.mxu0 %v32
    %110 = vmatpush1.msra.mxu0 %v31
    %111 = vmatprep.subr.mxu0 %v34
    %112 = vmatpush1.msra.mxu0 %v33
    %113 = vmatprep.subr.mxu0 %v36
    %114 = vmatpush1.msra.mxu0 %v35
    %115 = vmatprep.subr.mxu0 %v38
    %116 = vmatpush1.msra.mxu0 %v37
    %117 = vmatprep.subr.mxu0 %v40
    %118 = vmatpush1.msra.mxu0 %v39
    %119 = vmatprep.subr.mxu0 %v42
    %120 = vmatpush1.msra.mxu0 %v41
    %121 = vmatprep.subr.mxu0 %v44
    %122 = vmatpush1.msra.mxu0 %v43
    %123 = vmatprep.subr.mxu0 %v46
    %124 = vmatpush1.msra.mxu0 %v45
    %125 = vmatprep.subr.mxu0 %v48
    %126 = vmatpush1.msra.mxu0 %v47
    %127 = vmatprep.subr.mxu0 %v50
    %128 = vmatpush1.msra.mxu0 %v49
    %129 = vmatprep.subr.mxu0 %v52
    %130 = vmatpush1.msra.mxu0 %v51
    %131 = vmatprep.subr.mxu0 %v54
    %132 = vmatpush1.msra.mxu0 %v53
    %133 = vmatprep.subr.mxu0 %v56
    %134 = vmatpush1.msra.mxu0 %v55
    %135 = vmatprep.subr.mxu0 0.0
    %136 = vmatpush1.msra.mxu0 0.0
    %137 = vmatprep.subr.mxu0 0.0
    %138 = vmatpush1.msra.mxu0 0.0
    %139 = vmatprep.subr.mxu0 0.0
    %140 = vmatpush1.msra.mxu0 0.0
    %141 = vmatprep.subr.mxu0 0.0
    %142 = vmatpush1.msra.mxu0 0.0
    %143 = vmatprep.subr.mxu0 0.0
    %144 = vmatpush1.msra.mxu0 0.0
    %145 = vmatprep.subr.mxu0 0.0
    %146 = vmatpush1.msra.mxu0 0.0
    %147 = vmatprep.subr.mxu0 0.0
    %148 = vmatpush1.msra.mxu0 0.0
    %149 = vmatprep.subr.mxu0 0.0
    %150 = vmatpush1.msra.mxu0 0.0
    %151 = vmatprep.subr.mxu0 0.0
    %152 = vmatpush1.msra.mxu0 0.0
    %153 = vmatprep.subr.mxu0 0.0
    %154 = vmatpush1.msra.mxu0 0.0
    %155 = vmatprep.subr.mxu0 0.0
    %156 = vmatpush1.msra.mxu0 0.0
    %157 = vmatprep.subr.mxu0 0.0
    %158 = vmatpush1.msra.mxu0 0.0
    %159 = vmatprep.subr.mxu0 0.0
    %160 = vmatpush1.msra.mxu0 0.0
    %161 = vmatprep.subr.mxu0 0.0
    %162 = vmatpush1.msra.mxu0 0.0
    %163 = vmatprep.subr.mxu0 0.0
    %164 = vmatpush1.msra.mxu0 0.0
    %165 = vmatprep.subr.mxu0 0.0
    %166 = vmatpush1.msra.mxu0 0.0
    %167 = vmatprep.mubr.f32.mxu0 0.0
    %168 = vmatmul.mubr.f32.gmra.mrb[0].mxu0 %v84
    %v169 = vpop.f32.mrb[0].mxu0
    %v170 = vadd.f32 %v96, %v169
    %v171 = vpop.f32.mrb[0].mxu0
    %v172 = vadd.f32 %v100, %v171
    %173 = vmatprep.mubr.f32.mxu0 0.0
    %174 = vmatmul.mubr.f32.gmra.mrb[0].mxu0 %v85
    %v175 = vpop.f32.mrb[0].mxu0
    %v176 = vadd.f32 %v96, %v175
    %v177 = vpop.f32.mrb[0].mxu0
    %v178 = vadd.f32 %v100, %v177
    %179 = vmatprep.mubr.f32.mxu0 0.0
    %180 = vmatmul.mubr.f32.gmra.mrb[0].mxu0 %v86
    %v181 = vpop.f32.mrb[0].mxu0
    %v182 = vadd.f32 %v96, %v181
    %v183 = vpop.f32.mrb[0].mxu0
    %v184 = vadd.f32 %v100, %v183
    %185 = vmatprep.mubr.f32.mxu0 0.0
    %186 = vmatmul.mubr.f32.gmra.mrb[0].mxu0 %v87
    %v187 = vpop.f32.mrb[0].mxu0
    %v188 = vadd.f32 %v96, %v187
    %v189 = vpop.f32.mrb[0].mxu0
    %v190 = vadd.f32 %v100, %v189
    %191 = vmatprep.mubr.f32.mxu0 0.0
    %192 = vmatmul.mubr.f32.gmra.mrb[0].mxu0 %v88
    %v193 = vpop.f32.mrb[0].mxu0
    %v194 = vadd.f32 %v96, %v193
    %v195 = vpop.f32.mrb[0].mxu0
    %v196 = vadd.f32 %v100, %v195
    %197 = vmatprep.mubr.f32.mxu0 0.0
    %198 = vmatmul.mubr.f32.gmra.mrb[0].mxu0 %v89
    %v199 = vpop.f32.mrb[0].mxu0
    %v200 = vadd.f32 %v96, %v199
    %v201 = vpop.f32.mrb[0].mxu0
    %v202 = vadd.f32 %v100, %v201
    %203 = vmatprep.mubr.f32.mxu0 0.0
    %204 = vmatmul.mubr.f32.gmra.mrb[0].mxu0 %v90
    %v205 = vpop.f32.mrb[0].mxu0
    %v206 = vadd.f32 %v96, %v205
    %v207 = vpop.f32.mrb[0].mxu0
    %v208 = vadd.f32 %v100, %v207
    %209 = vmatprep.mubr.f32.mxu0 0.0
    %210 = vmatmul.mubr.f32.gmra.mrb[0].mxu0 %v91
    %v211 = vpop.f32.mrb[0].mxu0
    %v212 = vadd.f32 %v96, %v211
    %v213 = vpop.f32.mrb[0].mxu0
    %v214 = vadd.f32 %v100, %v213
    %215 = vdwg.mxu0
    %v216 = vlaneseq
    %v217 = vand.u32 %v216, 127
    %v218 = vadd.s32 %v217, 128
    %vm219 = vcmp.ge.s32.totalorder %v217, 192
    %vm220 = vcmp.ge.s32.totalorder %v218, 192
    %v221 = vsel %vm219, 1.0, 0.5
    %v222 = vsel %vm220, 1.0, 0.5
    %v223 = vsel %vm219, 0.0, 0.5
    %v224 = vsel %vm220, 0.0, 0.5
    %vm225 = vcmask 523264
    %v227 = vsel %vm225, 0.0, 0
    %229 = vmatprep.subr.mxu0 %v58
    %230 = vmatpush1.msra.mxu0 %v57
    %231 = vmatprep.subr.mxu0 %v60
    %232 = vmatpush1.msra.mxu0 %v59
    %233 = vmatprep.subr.mxu0 %v62
    %234 = vmatpush1.msra.mxu0 %v61
    %235 = vmatprep.subr.mxu0 %v64
    %236 = vmatpush1.msra.mxu0 %v63
    %237 = vmatprep.subr.mxu0 %v66
    %238 = vmatpush1.msra.mxu0 %v65
    %239 = vmatprep.subr.mxu0 %v68
    %240 = vmatpush1.msra.mxu0 %v67
    %241 = vmatprep.subr.mxu0 %v70
    %242 = vmatpush1.msra.mxu0 %v69
    %243 = vmatprep.subr.mxu0 %v72
    %244 = vmatpush1.msra.mxu0 %v71
    %245 = vmatprep.subr.mxu0 0.0
    %246 = vmatpush1.msra.mxu0 0.0
    %247 = vmatprep.subr.mxu0 0.0
    %248 = vmatpush1.msra.mxu0 0.0
    %249 = vmatprep.subr.mxu0 0.0
    %250 = vmatpush1.msra.mxu0 0.0
    %251 = vmatprep.subr.mxu0 0.0
    %252 = vmatpush1.msra.mxu0 0.0
    %253 = vmatprep.subr.mxu0 0.0
    %254 = vmatpush1.msra.mxu0 0.0
    %255 = vmatprep.subr.mxu0 0.0
    %256 = vmatpush1.msra.mxu0 0.0
    %257 = vmatprep.subr.mxu0 0.0
    %258 = vmatpush1.msra.mxu0 0.0
    %259 = vmatprep.subr.mxu0 0.0
    %260 = vmatpush1.msra.mxu0 0.0
    %261 = vmatprep.subr.mxu0 0.0
    %262 = vmatpush1.msra.mxu0 0.0
    %263 = vmatprep.subr.mxu0 0.0
    %264 = vmatpush1.msra.mxu0 0.0
    %265 = vmatprep.subr.mxu0 0.0
    %266 = vmatpush1.msra.mxu0 0.0
    %267 = vmatprep.subr.mxu0 0.0
    %268 = vmatpush1.msra.mxu0 0.0
    %269 = vmatprep.subr.mxu0 0.0
    %270 = vmatpush1.msra.mxu0 0.0
    %271 = vmatprep.subr.mxu0 0.0
    %272 = vmatpush1.msra.mxu0 0.0
    %273 = vmatprep.subr.mxu0 0.0
    %274 = vmatpush1.msra.mxu0 0.0
    %275 = vmatprep.subr.mxu0 0.0
    %276 = vmatpush1.msra.mxu0 0.0
    %277 = vmatprep.subr.mxu0 0.0
    %278 = vmatpush1.msra.mxu0 0.0
    %279 = vmatprep.subr.mxu0 0.0
    %280 = vmatpush1.msra.mxu0 0.0
    %281 = vmatprep.subr.mxu0 0.0
    %282 = vmatpush1.msra.mxu0 0.0
    %283 = vmatprep.subr.mxu0 0.0
    %284 = vmatpush1.msra.mxu0 0.0
    %285 = vmatprep.subr.mxu0 0.0
    %286 = vmatpush1.msra.mxu0 0.0
    %287 = vmatprep.subr.mxu0 0.0
    %288 = vmatpush1.msra.mxu0 0.0
    %289 = vmatprep.subr.mxu0 0.0
    %290 = vmatpush1.msra.mxu0 0.0
    %291 = vmatprep.subr.mxu0 0.0
    %292 = vmatpush1.msra.mxu0 0.0
    %293 = vmatprep.mubr.f32.mxu0 0.0
    %294 = vmatmul.mubr.f32.gmra.mrb[0].mxu0 %v227
    %v295 = vpop.f32.mrb[0].mxu0
    %v296 = vadd.f32 0.0, %v295
    %v297 = vpop.f32.mrb[0].mxu0
    %v298 = vadd.f32 0.0, %v297
    %299 = vdwg.mxu0
    %v300 = vadd.f32 %v170, %v296
    %v301 = vadd.f32 %v172, %v298
    %v302 = vmul.f32 %v300, %v221
    %v303 = vmul.f32 %v301, %v222
    %v304 = vtanh.pop %v302
    %v305 = vtanh.pop %v303
    %v306 = vmul.f32 %v304, %v221
    %v307 = vmul.f32 %v305, %v222
    %v308 = vadd.f32 %v306, %v223
    %v309 = vadd.f32 %v307, %v224
    %v310 = vmul.f32 %v308, 0.0
    %v311 = vmul.f32 %v308, %v309
    %313 = vrot.lane.b32.xlu0 %v311, 64
    %v314 = vpop.permute.xlu0 %313
    %v316 = vadd.f32 %v310, %v314
    %v317 = vtanh.pop %v316
    %v318 = vmul.f32 %v309, %v317
    %v320 = vsel %vm225, %v318, 0
    %322 = vmatprep.subr.mxu0 %v58
    %323 = vmatpush1.msra.mxu0 %v57
    %324 = vmatprep.subr.mxu0 %v60
    %325 = vmatpush1.msra.mxu0 %v59
    %326 = vmatprep.subr.mxu0 %v62
    %327 = vmatpush1.msra.mxu0 %v61
    %328 = vmatprep.subr.mxu0 %v64
    %329 = vmatpush1.msra.mxu0 %v63
    %330 = vmatprep.subr.mxu0 %v66
    %331 = vmatpush1.msra.mxu0 %v65
    %332 = vmatprep.subr.mxu0 %v68
    %333 = vmatpush1.msra.mxu0 %v67
    %334 = vmatprep.subr.mxu0 %v70
    %335 = vmatpush1.msra.mxu0 %v69
    %336 = vmatprep.subr.mxu0 %v72
    %337 = vmatpush1.msra.mxu0 %v71
    %338 = vmatprep.subr.mxu0 0.0
    %339 = vmatpush1.msra.mxu0 0.0
    %340 = vmatprep.subr.mxu0 0.0
    %341 = vmatpush1.msra.mxu0 0.0
    %342 = vmatprep.subr.mxu0 0.0
    %343 = vmatpush1.msra.mxu0 0.0
    %344 = vmatprep.subr.mxu0 0.0
    %345 = vmatpush1.msra.mxu0 0.0
    %346 = vmatprep.subr.mxu0 0.0
    %347 = vmatpush1.msra.mxu0 0.0
    %348 = vmatprep.subr.mxu0 0.0
    %349 = vmatpush1.msra.mxu0 0.0
    %350 = vmatprep.subr.mxu0 0.0
    %351 = vmatpush1.msra.mxu0 0.0
    %352 = vmatprep.subr.mxu0 0.0
    %353 = vmatpush1.msra.mxu0 0.0
    %354 = vmatprep.subr.mxu0 0.0
    %355 = vmatpush1.msra.mxu0 0.0
    %356 = vmatprep.subr.mxu0 0.0
    %357 = vmatpush1.msra.mxu0 0.0
    %358 = vmatprep.subr.mxu0 0.0
    %359 = vmatpush1.msra.mxu0 0.0
    %360 = vmatprep.subr.mxu0 0.0
    %361 = vmatpush1.msra.mxu0 0.0
    %362 = vmatprep.subr.mxu0 0.0
    %363 = vmatpush1.msra.mxu0 0.0
    %364 = vmatprep.subr.mxu0 0.0
    %365 = vmatpush1.msra.mxu0 0.0
    %366 = vmatprep.subr.mxu0 0.0
    %367 = vmatpush1.msra.mxu0 0.0
    %368 = vmatprep.subr.mxu0 0.0
    %369 = vmatpush1.msra.mxu0 0.0
    %370 = vmatprep.subr.mxu0 0.0
    %371 = vmatpush1.msra.mxu0 0.0
    %372 = vmatprep.subr.mxu0 0.0
    %373 = vmatpush1.msra.mxu0 0.0
    %374 = vmatprep.subr.mxu0 0.0
    %375 = vmatpush1.msra.mxu0 0.0
    %376 = vmatprep.subr.mxu0 0.0
    %377 = vmatpush1.msra.mxu0 0.0
    %378 = vmatprep.subr.mxu0 0.0
    %379 = vmatpush1.msra.mxu0 0.0
    %380 = vmatprep.subr.mxu0 0.0
    %381 = vmatpush1.msra.mxu0 0.0
    %382 = vmatprep.subr.mxu0 0.0
    %383 = vmatpush1.msra.mxu0 0.0
    %384 = vmatprep.subr.mxu0 0.0
    %385 = vmatpush1.msra.mxu0 0.0
    %386 = vmatprep.mubr.f32.mxu0 0.0
    %387 = vmatmul.mubr.f32.gmra.mrb[0].mxu0 %v320
    %v388 = vpop.f32.mrb[0].mxu0
    %v389 = vadd.f32 0.0, %v388
    %v390 = vpop.f32.mrb[0].mxu0
    %v391 = vadd.f32 0.0, %v390
    %392 = vdwg.mxu0
    %v393 = vadd.f32 %v176, %v389
    %v394 = vadd.f32 %v178, %v391
    %v395 = vmul.f32 %v393, %v221
    %v396 = vmul.f32 %v394, %v222
    %v397 = vtanh.pop %v395
    %v398 = vtanh.pop %v396
    %v399 = vmul.f32 %v397, %v221
    %v400 = vmul.f32 %v398, %v222
    %v401 = vadd.f32 %v399, %v223
    %v402 = vadd.f32 %v400, %v224
    %v403 = vmul.f32 %v401, %v316
    %v404 = vmul.f32 %v401, %v402
    %406 = vrot.lane.b32.xlu0 %v404, 64
    %v407 = vpop.permute.xlu0 %406
    %v409 = vadd.f32 %v403, %v407
    %v410 = vtanh.pop %v409
    %v411 = vmul.f32 %v402, %v410
    %v413 = vsel %vm225, %v411, 0
    %415 = vmatprep.subr.mxu0 %v58
    %416 = vmatpush1.msra.mxu0 %v57
    %417 = vmatprep.subr.mxu0 %v60
    %418 = vmatpush1.msra.mxu0 %v59
    %419 = vmatprep.subr.mxu0 %v62
    %420 = vmatpush1.msra.mxu0 %v61
    %421 = vmatprep.subr.mxu0 %v64
    %422 = vmatpush1.msra.mxu0 %v63
    %423 = vmatprep.subr.mxu0 %v66
    %424 = vmatpush1.msra.mxu0 %v65
    %425 = vmatprep.subr.mxu0 %v68
    %426 = vmatpush1.msra.mxu0 %v67
    %427 = vmatprep.subr.mxu0 %v70
    %428 = vmatpush1.msra.mxu0 %v69
    %429 = vmatprep.subr.mxu0 %v72
    %430 = vmatpush1.msra.mxu0 %v71
    %431 = vmatprep.subr.mxu0 0.0
    %432 = vmatpush1.msra.mxu0 0.0
    %433 = vmatprep.subr.mxu0 0.0
    %434 = vmatpush1.msra.mxu0 0.0
    %435 = vmatprep.subr.mxu0 0.0
    %436 = vmatpush1.msra.mxu0 0.0
    %437 = vmatprep.subr.mxu0 0.0
    %438 = vmatpush1.msra.mxu0 0.0
    %439 = vmatprep.subr.mxu0 0.0
    %440 = vmatpush1.msra.mxu0 0.0
    %441 = vmatprep.subr.mxu0 0.0
    %442 = vmatpush1.msra.mxu0 0.0
    %443 = vmatprep.subr.mxu0 0.0
    %444 = vmatpush1.msra.mxu0 0.0
    %445 = vmatprep.subr.mxu0 0.0
    %446 = vmatpush1.msra.mxu0 0.0
    %447 = vmatprep.subr.mxu0 0.0
    %448 = vmatpush1.msra.mxu0 0.0
    %449 = vmatprep.subr.mxu0 0.0
    %450 = vmatpush1.msra.mxu0 0.0
    %451 = vmatprep.subr.mxu0 0.0
    %452 = vmatpush1.msra.mxu0 0.0
    %453 = vmatprep.subr.mxu0 0.0
    %454 = vmatpush1.msra.mxu0 0.0
    %455 = vmatprep.subr.mxu0 0.0
    %456 = vmatpush1.msra.mxu0 0.0
    %457 = vmatprep.subr.mxu0 0.0
    %458 = vmatpush1.msra.mxu0 0.0
    %459 = vmatprep.subr.mxu0 0.0
    %460 = vmatpush1.msra.mxu0 0.0
    %461 = vmatprep.subr.mxu0 0.0
    %462 = vmatpush1.msra.mxu0 0.0
    %463 = vmatprep.subr.mxu0 0.0
    %464 = vmatpush1.msra.mxu0 0.0
    %465 = vmatprep.subr.mxu0 0.0
    %466 = vmatpush1.msra.mxu0 0.0
    %467 = vmatprep.subr.mxu0 0.0
    %468 = vmatpush1.msra.mxu0 0.0
    %469 = vmatprep.subr.mxu0 0.0
    %470 = vmatpush1.msra.mxu0 0.0
    %471 = vmatprep.subr.mxu0 0.0
    %472 = vmatpush1.msra.mxu0 0.0
    %473 = vmatprep.subr.mxu0 0.0
    %474 = vmatpush1.msra.mxu0 0.0
    %475 = vmatprep.subr.mxu0 0.0
    %476 = vmatpush1.msra.mxu0 0.0
    %477 = vmatprep.subr.mxu0 0.0
    %478 = vmatpush1.msra.mxu0 0.0
    %479 = vmatprep.mubr.f32.mxu0 0.0
    %480 = vmatmul.mubr.f32.gmra.mrb[0].mxu0 %v413
    %v481 = vpop.f32.mrb[0].mxu0
    %v482 = vadd.f32 0.0, %v481
    %v483 = vpop.f32.mrb[0].mxu0
    %v484 = vadd.f32 0.0, %v483
    %485 = vdwg.mxu0
    %v486 = vadd.f32 %v182, %v482
    %v487 = vadd.f32 %v184, %v484
    %v488 = vmul.f32 %v486, %v221
    %v489 = vmul.f32 %v487, %v222
    %v490 = vtanh.pop %v488
    %v491 = vtanh.pop %v489
    %v492 = vmul.f32 %v490, %v221
    %v493 = vmul.f32 %v491, %v222
    %v494 = vadd.f32 %v492, %v223
    %v495 = vadd.f32 %v493, %v224
    %v496 = vmul.f32 %v494, %v409
    %v497 = vmul.f32 %v494, %v495
    %499 = vrot.lane.b32.xlu0 %v497, 64
    %v500 = vpop.permute.xlu0 %499
    %v502 = vadd.f32 %v496, %v500
    %v503 = vtanh.pop %v502
    %v504 = vmul.f32 %v495, %v503
    %v506 = vsel %vm225, %v504, 0
    %508 = vmatprep.subr.mxu0 %v58
    %509 = vmatpush1.msra.mxu0 %v57
    %510 = vmatprep.subr.mxu0 %v60
    %511 = vmatpush1.msra.mxu0 %v59
    %512 = vmatprep.subr.mxu0 %v62
    %513 = vmatpush1.msra.mxu0 %v61
    %514 = vmatprep.subr.mxu0 %v64
    %515 = vmatpush1.msra.mxu0 %v63
    %516 = vmatprep.subr.mxu0 %v66
    %517 = vmatpush1.msra.mxu0 %v65
    %518 = vmatprep.subr.mxu0 %v68
    %519 = vmatpush1.msra.mxu0 %v67
    %520 = vmatprep.subr.mxu0 %v70
    %521 = vmatpush1.msra.mxu0 %v69
    %522 = vmatprep.subr.mxu0 %v72
    %523 = vmatpush1.msra.mxu0 %v71
    %524 = vmatprep.subr.mxu0 0.0
    %525 = vmatpush1.msra.mxu0 0.0
    %526 = vmatprep.subr.mxu0 0.0
    %527 = vmatpush1.msra.mxu0 0.0
    %528 = vmatprep.subr.mxu0 0.0
    %529 = vmatpush1.msra.mxu0 0.0
    %530 = vmatprep.subr.mxu0 0.0
    %531 = vmatpush1.msra.mxu0 0.0
    %532 = vmatprep.subr.mxu0 0.0
    %533 = vmatpush1.msra.mxu0 0.0
    %534 = vmatprep.subr.mxu0 0.0
    %535 = vmatpush1.msra.mxu0 0.0
    %536 = vmatprep.subr.mxu0 0.0
    %537 = vmatpush1.msra.mxu0 0.0
    %538 = vmatprep.subr.mxu0 0.0
    %539 = vmatpush1.msra.mxu0 0.0
    %540 = vmatprep.subr.mxu0 0.0
    %541 = vmatpush1.msra.mxu0 0.0
    %542 = vmatprep.subr.mxu0 0.0
    %543 = vmatpush1.msra.mxu0 0.0
    %544 = vmatprep.subr.mxu0 0.0
    %545 = vmatpush1.msra.mxu0 0.0
    %546 = vmatprep.subr.mxu0 0.0
    %547 = vmatpush1.msra.mxu0 0.0
    %548 = vmatprep.subr.mxu0 0.0
    %549 = vmatpush1.msra.mxu0 0.0
    %550 = vmatprep.subr.mxu0 0.0
    %551 = vmatpush1.msra.mxu0 0.0
    %552 = vmatprep.subr.mxu0 0.0
    %553 = vmatpush1.msra.mxu0 0.0
    %554 = vmatprep.subr.mxu0 0.0
    %555 = vmatpush1.msra.mxu0 0.0
    %556 = vmatprep.subr.mxu0 0.0
    %557 = vmatpush1.msra.mxu0 0.0
    %558 = vmatprep.subr.mxu0 0.0
    %559 = vmatpush1.msra.mxu0 0.0
    %560 = vmatprep.subr.mxu0 0.0
    %561 = vmatpush1.msra.mxu0 0.0
    %562 = vmatprep.subr.mxu0 0.0
    %563 = vmatpush1.msra.mxu0 0.0
    %564 = vmatprep.subr.mxu0 0.0
    %565 = vmatpush1.msra.mxu0 0.0
    %566 = vmatprep.subr.mxu0 0.0
    %567 = vmatpush1.msra.mxu0 0.0
    %568 = vmatprep.subr.mxu0 0.0
    %569 = vmatpush1.msra.mxu0 0.0
    %570 = vmatprep.subr.mxu0 0.0
    %571 = vmatpush1.msra.mxu0 0.0
    %572 = vmatprep.mubr.f32.mxu0 0.0
    %573 = vmatmul.mubr.f32.gmra.mrb[0].mxu0 %v506
    %v574 = vpop.f32.mrb[0].mxu0
    %v575 = vadd.f32 0.0, %v574
    %v576 = vpop.f32.mrb[0].mxu0
    %v577 = vadd.f32 0.0, %v576
    %578 = vdwg.mxu0
    %v579 = vadd.f32 %v188, %v575
    %v580 = vadd.f32 %v190, %v577
    %v581 = vmul.f32 %v579, %v221
    %v582 = vmul.f32 %v580, %v222
    %v583 = vtanh.pop %v581
    %v584 = vtanh.pop %v582
    %v585 = vmul.f32 %v583, %v221
    %v586 = vmul.f32 %v584, %v222
    %v587 = vadd.f32 %v585, %v223
    %v588 = vadd.f32 %v586, %v224
    %v589 = vmul.f32 %v587, %v502
    %v590 = vmul.f32 %v587, %v588
    %592 = vrot.lane.b32.xlu0 %v590, 64
    %v593 = vpop.permute.xlu0 %592
    %v595 = vadd.f32 %v589, %v593
    %v596 = vtanh.pop %v595
    %v597 = vmul.f32 %v588, %v596
    %v599 = vsel %vm225, %v597, 0
    %601 = vmatprep.subr.mxu0 %v58
    %602 = vmatpush1.msra.mxu0 %v57
    %603 = vmatprep.subr.mxu0 %v60
    %604 = vmatpush1.msra.mxu0 %v59
    %605 = vmatprep.subr.mxu0 %v62
    %606 = vmatpush1.msra.mxu0 %v61
    %607 = vmatprep.subr.mxu0 %v64
    %608 = vmatpush1.msra.mxu0 %v63
    %609 = vmatprep.subr.mxu0 %v66
    %610 = vmatpush1.msra.mxu0 %v65
    %611 = vmatprep.subr.mxu0 %v68
    %612 = vmatpush1.msra.mxu0 %v67
    %613 = vmatprep.subr.mxu0 %v70
    %614 = vmatpush1.msra.mxu0 %v69
    %615 = vmatprep.subr.mxu0 %v72
    %616 = vmatpush1.msra.mxu0 %v71
    %617 = vmatprep.subr.mxu0 0.0
    %618 = vmatpush1.msra.mxu0 0.0
    %619 = vmatprep.subr.mxu0 0.0
    %620 = vmatpush1.msra.mxu0 0.0
    %621 = vmatprep.subr.mxu0 0.0
    %622 = vmatpush1.msra.mxu0 0.0
    %623 = vmatprep.subr.mxu0 0.0
    %624 = vmatpush1.msra.mxu0 0.0
    %625 = vmatprep.subr.mxu0 0.0
    %626 = vmatpush1.msra.mxu0 0.0
    %627 = vmatprep.subr.mxu0 0.0
    %628 = vmatpush1.msra.mxu0 0.0
    %629 = vmatprep.subr.mxu0 0.0
    %630 = vmatpush1.msra.mxu0 0.0
    %631 = vmatprep.subr.mxu0 0.0
    %632 = vmatpush1.msra.mxu0 0.0
    %633 = vmatprep.subr.mxu0 0.0
    %634 = vmatpush1.msra.mxu0 0.0
    %635 = vmatprep.subr.mxu0 0.0
    %636 = vmatpush1.msra.mxu0 0.0
    %637 = vmatprep.subr.mxu0 0.0
    %638 = vmatpush1.msra.mxu0 0.0
    %639 = vmatprep.subr.mxu0 0.0
    %640 = vmatpush1.msra.mxu0 0.0
    %641 = vmatprep.subr.mxu0 0.0
    %642 = vmatpush1.msra.mxu0 0.0
    %643 = vmatprep.subr.mxu0 0.0
    %644 = vmatpush1.msra.mxu0 0.0
    %645 = vmatprep.subr.mxu0 0.0
    %646 = vmatpush1.msra.mxu0 0.0
    %647 = vmatprep.subr.mxu0 0.0
    %648 = vmatpush1.msra.mxu0 0.0
    %649 = vmatprep.subr.mxu0 0.0
    %650 = vmatpush1.msra.mxu0 0.0
    %651 = vmatprep.subr.mxu0 0.0
    %652 = vmatpush1.msra.mxu0 0.0
    %653 = vmatprep.subr.mxu0 0.0
    %654 = vmatpush1.msra.mxu0 0.0
    %655 = vmatprep.subr.mxu0 0.0
    %656 = vmatpush1.msra.mxu0 0.0
    %657 = vmatprep.subr.mxu0 0.0
    %658 = vmatpush1.msra.mxu0 0.0
    %659 = vmatprep.subr.mxu0 0.0
    %660 = vmatpush1.msra.mxu0 0.0
    %661 = vmatprep.subr.mxu0 0.0
    %662 = vmatpush1.msra.mxu0 0.0
    %663 = vmatprep.subr.mxu0 0.0
    %664 = vmatpush1.msra.mxu0 0.0
    %665 = vmatprep.mubr.f32.mxu0 0.0
    %666 = vmatmul.mubr.f32.gmra.mrb[0].mxu0 %v599
    %v667 = vpop.f32.mrb[0].mxu0
    %v668 = vadd.f32 0.0, %v667
    %v669 = vpop.f32.mrb[0].mxu0
    %v670 = vadd.f32 0.0, %v669
    %671 = vdwg.mxu0
    %v672 = vadd.f32 %v194, %v668
    %v673 = vadd.f32 %v196, %v670
    %v674 = vmul.f32 %v672, %v221
    %v675 = vmul.f32 %v673, %v222
    %v676 = vtanh.pop %v674
    %v677 = vtanh.pop %v675
    %v678 = vmul.f32 %v676, %v221
    %v679 = vmul.f32 %v677, %v222
    %v680 = vadd.f32 %v678, %v223
    %v681 = vadd.f32 %v679, %v224
    %v682 = vmul.f32 %v680, %v595
    %v683 = vmul.f32 %v680, %v681
    %685 = vrot.lane.b32.xlu0 %v683, 64
    %v686 = vpop.permute.xlu0 %685
    %v688 = vadd.f32 %v682, %v686
    %v689 = vtanh.pop %v688
    %v690 = vmul.f32 %v681, %v689
    %v692 = vsel %vm225, %v690, 0
    %694 = vmatprep.subr.mxu0 %v58
    %695 = vmatpush1.msra.mxu0 %v57
    %696 = vmatprep.subr.mxu0 %v60
    %697 = vmatpush1.msra.mxu0 %v59
    %698 = vmatprep.subr.mxu0 %v62
    %699 = vmatpush1.msra.mxu0 %v61
    %700 = vmatprep.subr.mxu0 %v64
    %701 = vmatpush1.msra.mxu0 %v63
    %702 = vmatprep.subr.mxu0 %v66
    %703 = vmatpush1.msra.mxu0 %v65
    %704 = vmatprep.subr.mxu0 %v68
    %705 = vmatpush1.msra.mxu0 %v67
    %706 = vmatprep.subr.mxu0 %v70
    %707 = vmatpush1.msra.mxu0 %v69
    %708 = vmatprep.subr.mxu0 %v72
    %709 = vmatpush1.msra.mxu0 %v71
    %710 = vmatprep.subr.mxu0 0.0
    %711 = vmatpush1.msra.mxu0 0.0
    %712 = vmatprep.subr.mxu0 0.0
    %713 = vmatpush1.msra.mxu0 0.0
    %714 = vmatprep.subr.mxu0 0.0
    %715 = vmatpush1.msra.mxu0 0.0
    %716 = vmatprep.subr.mxu0 0.0
    %717 = vmatpush1.msra.mxu0 0.0
    %718 = vmatprep.subr.mxu0 0.0
    %719 = vmatpush1.msra.mxu0 0.0
    %720 = vmatprep.subr.mxu0 0.0
    %721 = vmatpush1.msra.mxu0 0.0
    %722 = vmatprep.subr.mxu0 0.0
    %723 = vmatpush1.msra.mxu0 0.0
    %724 = vmatprep.subr.mxu0 0.0
    %725 = vmatpush1.msra.mxu0 0.0
    %726 = vmatprep.subr.mxu0 0.0
    %727 = vmatpush1.msra.mxu0 0.0
    %728 = vmatprep.subr.mxu0 0.0
    %729 = vmatpush1.msra.mxu0 0.0
    %730 = vmatprep.subr.mxu0 0.0
    %731 = vmatpush1.msra.mxu0 0.0
    %732 = vmatprep.subr.mxu0 0.0
    %733 = vmatpush1.msra.mxu0 0.0
    %734 = vmatprep.subr.mxu0 0.0
    %735 = vmatpush1.msra.mxu0 0.0
    %736 = vmatprep.subr.mxu0 0.0
    %737 = vmatpush1.msra.mxu0 0.0
    %738 = vmatprep.subr.mxu0 0.0
    %739 = vmatpush1.msra.mxu0 0.0
    %740 = vmatprep.subr.mxu0 0.0
    %741 = vmatpush1.msra.mxu0 0.0
    %742 = vmatprep.subr.mxu0 0.0
    %743 = vmatpush1.msra.mxu0 0.0
    %744 = vmatprep.subr.mxu0 0.0
    %745 = vmatpush1.msra.mxu0 0.0
    %746 = vmatprep.subr.mxu0 0.0
    %747 = vmatpush1.msra.mxu0 0.0
    %748 = vmatprep.subr.mxu0 0.0
    %749 = vmatpush1.msra.mxu0 0.0
    %750 = vmatprep.subr.mxu0 0.0
    %751 = vmatpush1.msra.mxu0 0.0
    %752 = vmatprep.subr.mxu0 0.0
    %753 = vmatpush1.msra.mxu0 0.0
    %754 = vmatprep.subr.mxu0 0.0
    %755 = vmatpush1.msra.mxu0 0.0
    %756 = vmatprep.subr.mxu0 0.0
    %757 = vmatpush1.msra.mxu0 0.0
    %758 = vmatprep.mubr.f32.mxu0 0.0
    %759 = vmatmul.mubr.f32.gmra.mrb[0].mxu0 %v692
    %v760 = vpop.f32.mrb[0].mxu0
    %v761 = vadd.f32 0.0, %v760
    %v762 = vpop.f32.mrb[0].mxu0
    %v763 = vadd.f32 0.0, %v762
    %764 = vdwg.mxu0
    %v765 = vadd.f32 %v200, %v761
    %v766 = vadd.f32 %v202, %v763
    %v767 = vmul.f32 %v765, %v221
    %v768 = vmul.f32 %v766, %v222
    %v769 = vtanh.pop %v767
    %v770 = vtanh.pop %v768
    %v771 = vmul.f32 %v769, %v221
    %v772 = vmul.f32 %v770, %v222
    %v773 = vadd.f32 %v771, %v223
    %v774 = vadd.f32 %v772, %v224
    %v775 = vmul.f32 %v773, %v688
    %v776 = vmul.f32 %v773, %v774
    %778 = vrot.lane.b32.xlu0 %v776, 64
    %v779 = vpop.permute.xlu0 %778
    %v781 = vadd.f32 %v775, %v779
    %v782 = vtanh.pop %v781
    %v783 = vmul.f32 %v774, %v782
    %v785 = vsel %vm225, %v783, 0
    %787 = vmatprep.subr.mxu0 %v58
    %788 = vmatpush1.msra.mxu0 %v57
    %789 = vmatprep.subr.mxu0 %v60
    %790 = vmatpush1.msra.mxu0 %v59
    %791 = vmatprep.subr.mxu0 %v62
    %792 = vmatpush1.msra.mxu0 %v61
    %793 = vmatprep.subr.mxu0 %v64
    %794 = vmatpush1.msra.mxu0 %v63
    %795 = vmatprep.subr.mxu0 %v66
    %796 = vmatpush1.msra.mxu0 %v65
    %797 = vmatprep.subr.mxu0 %v68
    %798 = vmatpush1.msra.mxu0 %v67
    %799 = vmatprep.subr.mxu0 %v70
    %800 = vmatpush1.msra.mxu0 %v69
    %801 = vmatprep.subr.mxu0 %v72
    %802 = vmatpush1.msra.mxu0 %v71
    %803 = vmatprep.subr.mxu0 0.0
    %804 = vmatpush1.msra.mxu0 0.0
    %805 = vmatprep.subr.mxu0 0.0
    %806 = vmatpush1.msra.mxu0 0.0
    %807 = vmatprep.subr.mxu0 0.0
    %808 = vmatpush1.msra.mxu0 0.0
    %809 = vmatprep.subr.mxu0 0.0
    %810 = vmatpush1.msra.mxu0 0.0
    %811 = vmatprep.subr.mxu0 0.0
    %812 = vmatpush1.msra.mxu0 0.0
    %813 = vmatprep.subr.mxu0 0.0
    %814 = vmatpush1.msra.mxu0 0.0
    %815 = vmatprep.subr.mxu0 0.0
    %816 = vmatpush1.msra.mxu0 0.0
    %817 = vmatprep.subr.mxu0 0.0
    %818 = vmatpush1.msra.mxu0 0.0
    %819 = vmatprep.subr.mxu0 0.0
    %820 = vmatpush1.msra.mxu0 0.0
    %821 = vmatprep.subr.mxu0 0.0
    %822 = vmatpush1.msra.mxu0 0.0
    %823 = vmatprep.subr.mxu0 0.0
    %824 = vmatpush1.msra.mxu0 0.0
    %825 = vmatprep.subr.mxu0 0.0
    %826 = vmatpush1.msra.mxu0 0.0
    %827 = vmatprep.subr.mxu0 0.0
    %828 = vmatpush1.msra.mxu0 0.0
    %829 = vmatprep.subr.mxu0 0.0
    %830 = vmatpush1.msra.mxu0 0.0
    %831 = vmatprep.subr.mxu0 0.0
    %832 = vmatpush1.msra.mxu0 0.0
    %833 = vmatprep.subr.mxu0 0.0
    %834 = vmatpush1.msra.mxu0 0.0
    %835 = vmatprep.subr.mxu0 0.0
    %836 = vmatpush1.msra.mxu0 0.0
    %837 = vmatprep.subr.mxu0 0.0
    %838 = vmatpush1.msra.mxu0 0.0
    %839 = vmatprep.subr.mxu0 0.0
    %840 = vmatpush1.msra.mxu0 0.0
    %841 = vmatprep.subr.mxu0 0.0
    %842 = vmatpush1.msra.mxu0 0.0
    %843 = vmatprep.subr.mxu0 0.0
    %844 = vmatpush1.msra.mxu0 0.0
    %845 = vmatprep.subr.mxu0 0.0
    %846 = vmatpush1.msra.mxu0 0.0
    %847 = vmatprep.subr.mxu0 0.0
    %848 = vmatpush1.msra.mxu0 0.0
    %849 = vmatprep.subr.mxu0 0.0
    %850 = vmatpush1.msra.mxu0 0.0
    %851 = vmatprep.mubr.f32.mxu0 0.0
    %852 = vmatmul.mubr.f32.gmra.mrb[0].mxu0 %v785
    %v853 = vpop.f32.mrb[0].mxu0
    %v854 = vadd.f32 0.0, %v853
    %v855 = vpop.f32.mrb[0].mxu0
    %v856 = vadd.f32 0.0, %v855
    %857 = vdwg.mxu0
    %v858 = vadd.f32 %v206, %v854
    %v859 = vadd.f32 %v208, %v856
    %v860 = vmul.f32 %v858, %v221
    %v861 = vmul.f32 %v859, %v222
    %v862 = vtanh.pop %v860
    %v863 = vtanh.pop %v861
    %v864 = vmul.f32 %v862, %v221
    %v865 = vmul.f32 %v863, %v222
    %v866 = vadd.f32 %v864, %v223
    %v867 = vadd.f32 %v865, %v224
    %v868 = vmul.f32 %v866, %v781
    %v869 = vmul.f32 %v866, %v867
    %871 = vrot.lane.b32.xlu0 %v869, 64
    %v872 = vpop.permute.xlu0 %871
    %v874 = vadd.f32 %v868, %v872
    %v875 = vtanh.pop %v874
    %v876 = vmul.f32 %v867, %v875
    %v878 = vsel %vm225, %v876, 0
    %880 = vmatprep.subr.mxu0 %v58
    %881 = vmatpush1.msra.mxu0 %v57
    %882 = vmatprep.subr.mxu0 %v60
    %883 = vmatpush1.msra.mxu0 %v59
    %884 = vmatprep.subr.mxu0 %v62
    %885 = vmatpush1.msra.mxu0 %v61
    %886 = vmatprep.subr.mxu0 %v64
    %887 = vmatpush1.msra.mxu0 %v63
    %888 = vmatprep.subr.mxu0 %v66
    %889 = vmatpush1.msra.mxu0 %v65
    %890 = vmatprep.subr.mxu0 %v68
    %891 = vmatpush1.msra.mxu0 %v67
    %892 = vmatprep.subr.mxu0 %v70
    %893 = vmatpush1.msra.mxu0 %v69
    %894 = vmatprep.subr.mxu0 %v72
    %895 = vmatpush1.msra.mxu0 %v71
    %896 = vmatprep.subr.mxu0 0.0
    %897 = vmatpush1.msra.mxu0 0.0
    %898 = vmatprep.subr.mxu0 0.0
    %899 = vmatpush1.msra.mxu0 0.0
    %900 = vmatprep.subr.mxu0 0.0
    %901 = vmatpush1.msra.mxu0 0.0
    %902 = vmatprep.subr.mxu0 0.0
    %903 = vmatpush1.msra.mxu0 0.0
    %904 = vmatprep.subr.mxu0 0.0
    %905 = vmatpush1.msra.mxu0 0.0
    %906 = vmatprep.subr.mxu0 0.0
    %907 = vmatpush1.msra.mxu0 0.0
    %908 = vmatprep.subr.mxu0 0.0
    %909 = vmatpush1.msra.mxu0 0.0
    %910 = vmatprep.subr.mxu0 0.0
    %911 = vmatpush1.msra.mxu0 0.0
    %912 = vmatprep.subr.mxu0 0.0
    %913 = vmatpush1.msra.mxu0 0.0
    %914 = vmatprep.subr.mxu0 0.0
    %915 = vmatpush1.msra.mxu0 0.0
    %916 = vmatprep.subr.mxu0 0.0
    %917 = vmatpush1.msra.mxu0 0.0
    %918 = vmatprep.subr.mxu0 0.0
    %919 = vmatpush1.msra.mxu0 0.0
    %920 = vmatprep.subr.mxu0 0.0
    %921 = vmatpush1.msra.mxu0 0.0
    %922 = vmatprep.subr.mxu0 0.0
    %923 = vmatpush1.msra.mxu0 0.0
    %924 = vmatprep.subr.mxu0 0.0
    %925 = vmatpush1.msra.mxu0 0.0
    %926 = vmatprep.subr.mxu0 0.0
    %927 = vmatpush1.msra.mxu0 0.0
    %928 = vmatprep.subr.mxu0 0.0
    %929 = vmatpush1.msra.mxu0 0.0
    %930 = vmatprep.subr.mxu0 0.0
    %931 = vmatpush1.msra.mxu0 0.0
    %932 = vmatprep.subr.mxu0 0.0
    %933 = vmatpush1.msra.mxu0 0.0
    %934 = vmatprep.subr.mxu0 0.0
    %935 = vmatpush1.msra.mxu0 0.0
    %936 = vmatprep.subr.mxu0 0.0
    %937 = vmatpush1.msra.mxu0 0.0
    %938 = vmatprep.subr.mxu0 0.0
    %939 = vmatpush1.msra.mxu0 0.0
    %940 = vmatprep.subr.mxu0 0.0
    %941 = vmatpush1.msra.mxu0 0.0
    %942 = vmatprep.subr.mxu0 0.0
    %943 = vmatpush1.msra.mxu0 0.0
    %944 = vmatprep.mubr.f32.mxu0 0.0
    %945 = vmatmul.mubr.f32.gmra.mrb[0].mxu0 %v878
    %v946 = vpop.f32.mrb[0].mxu0
    %v947 = vadd.f32 0.0, %v946
    %v948 = vpop.f32.mrb[0].mxu0
    %v949 = vadd.f32 0.0, %v948
    %950 = vdwg.mxu0
    %v951 = vadd.f32 %v212, %v947
    %v952 = vadd.f32 %v214, %v949
    %v953 = vmul.f32 %v951, %v221
    %v954 = vmul.f32 %v952, %v222
    %v955 = vtanh.pop %v953
    %v956 = vtanh.pop %v954
    %v957 = vmul.f32 %v955, %v221
    %v958 = vmul.f32 %v956, %v222
    %v959 = vadd.f32 %v957, %v223
    %v960 = vadd.f32 %v958, %v224
    %v961 = vmul.f32 %v959, %v874
    %v962 = vmul.f32 %v959, %v960
    %964 = vrot.lane.b32.xlu0 %v962, 64
    %v965 = vpop.permute.xlu0 %964
    %v967 = vadd.f32 %v961, %v965
    %v968 = vtanh.pop %v967
    %v969 = vmul.f32 %v960, %v968
    %v971 = vsel %vm225, %v969, 0
    %973 = vmatprep.subr.mxu0 0.0
    %974 = vmatpush1.msra.mxu0 %v75
    %975 = vmatprep.subr.mxu0 0.0
    %976 = vmatpush1.msra.mxu0 %v76
    %977 = vmatprep.subr.mxu0 0.0
    %978 = vmatpush1.msra.mxu0 %v77
    %979 = vmatprep.subr.mxu0 0.0
    %980 = vmatpush1.msra.mxu0 %v78
    %981 = vmatprep.subr.mxu0 0.0
    %982 = vmatpush1.msra.mxu0 %v79
    %983 = vmatprep.subr.mxu0 0.0
    %984 = vmatpush1.msra.mxu0 %v80
    %985 = vmatprep.subr.mxu0 0.0
    %986 = vmatpush1.msra.mxu0 %v81
    %987 = vmatprep.subr.mxu0 0.0
    %988 = vmatpush1.msra.mxu0 %v82
    %989 = vmatprep.subr.mxu0 0.0
    %990 = vmatpush1.msra.mxu0 0.0
    %991 = vmatprep.subr.mxu0 0.0
    %992 = vmatpush1.msra.mxu0 0.0
    %993 = vmatprep.subr.mxu0 0.0
    %994 = vmatpush1.msra.mxu0 0.0
    %995 = vmatprep.subr.mxu0 0.0
    %996 = vmatpush1.msra.mxu0 0.0
    %997 = vmatprep.subr.mxu0 0.0
    %998 = vmatpush1.msra.mxu0 0.0
    %999 = vmatprep.subr.mxu0 0.0
    %1000 = vmatpush1.msra.mxu0 0.0
    %1001 = vmatprep.subr.mxu0 0.0
    %1002 = vmatpush1.msra.mxu0 0.0
    %1003 = vmatprep.subr.mxu0 0.0
    %1004 = vmatpush1.msra.mxu0 0.0
    %1005 = vmatprep.subr.mxu0 0.0
    %1006 = vmatpush1.msra.mxu0 0.0
    %1007 = vmatprep.subr.mxu0 0.0
    %1008 = vmatpush1.msra.mxu0 0.0
    %1009 = vmatprep.subr.mxu0 0.0
    %1010 = vmatpush1.msra.mxu0 0.0
    %1011 = vmatprep.subr.mxu0 0.0
    %1012 = vmatpush1.msra.mxu0 0.0
    %1013 = vmatprep.subr.mxu0 0.0
    %1014 = vmatpush1.msra.mxu0 0.0
    %1015 = vmatprep.subr.mxu0 0.0
    %1016 = vmatpush1.msra.mxu0 0.0
    %1017 = vmatprep.subr.mxu0 0.0
    %1018 = vmatpush1.msra.mxu0 0.0
    %1019 = vmatprep.subr.mxu0 0.0
    %1020 = vmatpush1.msra.mxu0 0.0
    %1021 = vmatprep.subr.mxu0 0.0
    %1022 = vmatpush1.msra.mxu0 0.0
    %1023 = vmatprep.subr.mxu0 0.0
    %1024 = vmatpush1.msra.mxu0 0.0
    %1025 = vmatprep.subr.mxu0 0.0
    %1026 = vmatpush1.msra.mxu0 0.0
    %1027 = vmatprep.subr.mxu0 0.0
    %1028 = vmatpush1.msra.mxu0 0.0
    %1029 = vmatprep.subr.mxu0 0.0
    %1030 = vmatpush1.msra.mxu0 0.0
    %1031 = vmatprep.subr.mxu0 0.0
    %1032 = vmatpush1.msra.mxu0 0.0
    %1033 = vmatprep.subr.mxu0 0.0
    %1034 = vmatpush1.msra.mxu0 0.0
    %1035 = vmatprep.subr.mxu0 0.0
    %1036 = vmatpush1.msra.mxu0 0.0
    %1037 = vmatprep.mubr.f32.mxu0 0.0
    %1038 = vmatmul.mubr.f32.gmra.mrb[0].mxu0 %v971
    %v1039 = vpop.f32.mrb[0].mxu0
    %v1040 = vadd.f32 %v83, %v1039
    %v1041 = vpop.f32.mrb[0].mxu0
    %1042 = vdwg.mxu0
    %1043 = vst [vmem:[%s2] sm:$0xff] %v1040
    // Predicated region
    $region14: #{relationship_lstm_forward.1} parent=1 // pred_check
      _
    $region15: #{relationship_lstm_forward.1} parent=1 // pred_check_branch
      %1045 = sbr.rel (0) target = $region17
    $region16: #{relationship_lstm_forward.1} parent=1 // pred_region
      _
    $region17: #{relationship_lstm_forward.1} parent=1 // pred_fallthru
      _
    // Predicated region
    $region18: #{relationship_lstm_forward.1} parent=1 // pred_check
      _
    $region19: #{relationship_lstm_forward.1} parent=1 // pred_check_branch
      %1047 = sbr.rel (0) target = $region21
    $region20: #{relationship_lstm_forward.1} parent=1 // pred_region
      _
    $region21: #{relationship_lstm_forward.1} parent=1 // pred_fallthru
      _
    %1048 = vsyncpa [#allocation3], 1

</llo_original>
